<compile_context>
chip_gen: v5e
topology: v5e:2x2
jax: 0.10.0
libtpu: 0.0.40
codegen_flags: <defaults>
</compile_context>

<pallas_src>
import functools

import jax
import jax.numpy as jnp
from jax.experimental import pallas as pl
from jax.experimental.pallas import tpu as pltpu


_VMEM_LIMIT = 32 * 1024 * 1024


def _round_up(x, m):
    return (x + m - 1) // m * m


# ----------------------------------------------------------------------------
# Pallas kernels
# ----------------------------------------------------------------------------
def _conv_gemm_kernel(*refs, ntaps, cin, relu, has_res):
    """Single-pass fused conv GEMM.

    refs = (w, bias, tap_0 .. tap_{ntaps-1}, [residual], out)
      w     : [ntaps*cin, tn] bf16  (BN scale folded in, per-tap row slabs)
      bias  : [1, tn]         f32   (BN shift)
      tap_t : [tm, cin]       bf16
      out   : [tm, tn]        bf16
    The whole K axis is inside the block -> no k grid axis, no scratch
    accumulator, no pl.when init/finalize; epilogue = +bias (+res) (+ReLU).
    """
    w_ref, b_ref = refs[0], refs[1]
    taps = refs[2:2 + ntaps]
    res_ref = refs[2 + ntaps] if has_res else None
    o_ref = refs[-1]

    if ntaps == 1:
        acc = jnp.dot(taps[0][...], w_ref[...], preferred_element_type=jnp.float32)
    else:
        acc = jnp.dot(taps[0][...], w_ref[pl.ds(0, cin), :],
                      preferred_element_type=jnp.float32)
        for t in range(1, ntaps):
            acc = acc + jnp.dot(taps[t][...], w_ref[pl.ds(t * cin, cin), :],
                                preferred_element_type=jnp.float32)

    acc = acc + b_ref[...]
    if has_res:
        acc = acc + res_ref[...].astype(jnp.float32)
    if relu:
        acc = jnp.maximum(acc, 0.0)
    o_ref[...] = acc.astype(o_ref.dtype)


def _max9_kernel(*refs):
    """9 taps as separate lane-dense [tm, C] inputs -> pairwise VPU max tree."""
    o_ref = refs[-1]
    t = refs[0][...]
    for r in refs[1:-1]:
        t = jnp.maximum(t, r[...])
    o_ref[...] = t


# ----------------------------------------------------------------------------
# Tiling helpers
# ----------------------------------------------------------------------------
def _pick_m_tiles(m):
    """Pad M to a multiple of 16 (bf16 sublane packing); tm=256 for large M."""
    if m <= 256:
        mp = _round_up(m, 16)
        return mp, mp
    mp = _round_up(m, 256)
    return mp, 256


def _pick_tn(np_, m_grid, k):
    """Largest lane-dense N tile that keeps the weight block small and keeps
    >= 2 parallel grid tiles whenever possible (v7x has 2 TensorCores)."""
    cands = [c for c in (512, 256, 128) if c <= np_ and np_ % c == 0]
    if not cands:
        return np_
    for c in cands:
        vmem_ok = k * c * 2 <= (6 << 20)            # (K, tn) bf16 weight block
        grid_ok = (m_grid * (np_ // c) >= 2) or (c == cands[-1])
        if vmem_ok and grid_ok:
            return c
    return cands[-1]


# ----------------------------------------------------------------------------
# GEMM wrapper (fused BN bias / residual / ReLU), single-pass over K
# ----------------------------------------------------------------------------
def conv_gemm(taps, w, bias, relu, residual=None):
    """taps: list of [M, cin] bf16 -- one per conv tap (already lane-dense).
       w: [ntaps*cin, Np] bf16 (pre-padded at init); bias: [1, Np] f32."""
    ntaps = len(taps)
    M, cin = taps[0].shape
    K, Np = w.shape
    assert K == ntaps * cin, (K, ntaps, cin)

    Mp, tm = _pick_m_tiles(M)
    m_grid = Mp // tm
    tn = _pick_tn(Np, m_grid, K)
    n_grid = Np // tn

    if Mp != M:
        taps = [jnp.pad(t, ((0, Mp - M), (0, 0))) for t in taps]
        if residual is not None:
            residual = jnp.pad(residual, ((0, Mp - M), (0, 0)))

    in_specs = [
        pl.BlockSpec((K, tn), lambda i, j: (0, j)),     # full-K weight slab
        pl.BlockSpec((1, tn), lambda i, j: (0, j)),     # BN shift
    ]
    in_specs += [pl.BlockSpec((tm, cin), lambda i, j: (i, 0)) for _ in range(ntaps)]
    args = [w, bias] + list(taps)

    if residual is not None:
        in_specs.append(pl.BlockSpec((tm, tn), lambda i, j: (i, j)))
        args.append(residual.astype(jnp.bfloat16))

    kern = functools.partial(_conv_gemm_kernel, ntaps=ntaps, cin=cin,
                             relu=relu, has_res=residual is not None)

    out = pl.pallas_call(
        kern,
        out_shape=jax.ShapeDtypeStruct((Mp, Np), jnp.bfloat16),
        grid_spec=pltpu.PrefetchScalarGridSpec(
            num_scalar_prefetch=0,
            grid=(m_grid, n_grid),
            in_specs=in_specs,
            out_specs=pl.BlockSpec((tm, tn), lambda i, j: (i, j)),
        ),
        compiler_params=pltpu.CompilerParams(
            dimension_semantics=("parallel", "parallel"),
            vmem_limit_bytes=_VMEM_LIMIT,
        ),
    )(*args)

    return out[:M] if Mp != M else out


# ----------------------------------------------------------------------------
# JAX glue: tap extraction (pure slicing, no compute)
# ----------------------------------------------------------------------------
def _extract_patches(x, kh, kw, stride, pad, pad_value=0.0):
    B, H, W, C = x.shape
    xp = jnp.pad(x, ((0, 0), (pad, pad), (pad, pad), (0, 0)),
                 constant_values=pad_value) if pad else x
    Ho = (H + 2 * pad - kh) // stride + 1
    Wo = (W + 2 * pad - kw) // stride + 1
    taps = []
    for i in range(kh):
        for j in range(kw):
            taps.append(xp[:, i:i + stride * Ho:stride, j:j + stride * Wo:stride, :])
    return taps, Ho, Wo


def conv_bn(x, p, stride, pad, relu, residual=None):
    """NHWC conv + fused BN (+residual) (+ReLU)."""
    kh, kw = p["kh"], p["kw"]
    B = x.shape[0]
    if kh == 1 and kw == 1:
        xs = x[:, ::stride, ::stride, :] if stride > 1 else x
        _, Ho, Wo, C = xs.shape
        taps = [xs.reshape(B * Ho * Wo, C)]
    else:
        taps4d, Ho, Wo = _extract_patches(x, kh, kw, stride, pad)
        if p["concat"]:     # 7x7 stem, Cin=3: one K=147 GEMM
            taps = [jnp.concatenate(taps4d, axis=-1).reshape(B * Ho * Wo, -1)]
        else:               # 3x3: 9 separate lane-dense taps, no im2col concat
            taps = [t.reshape(B * Ho * Wo, -1) for t in taps4d]

    M = B * Ho * Wo
    r2d = residual.reshape(M, -1) if residual is not None else None
    out = conv_gemm(taps, p["w"], p["bias"], relu, r2d)
    return out.reshape(B, Ho, Wo, -1)


def maxpool_3x3_s2(x):
    B, H, W, C = x.shape            # C is a multiple of 128 by construction
    taps4d, Ho, Wo = _extract_patches(x, 3, 3, 2, 1, pad_value=-jnp.inf)
    M = B * Ho * Wo
    taps = [t.reshape(M, C) for t in taps4d]
    Mp, tm = _pick_m_tiles(M)
    if Mp != M:
        taps = [jnp.pad(t, ((0, Mp - M), (0, 0))) for t in taps]

    out = pl.pallas_call(
        _max9_kernel,
        out_shape=jax.ShapeDtypeStruct((Mp, C), x.dtype),
        grid=(Mp // tm,),
        in_specs=[pl.BlockSpec((tm, C), lambda i: (i, 0)) for _ in range(9)],
        out_specs=pl.BlockSpec((tm, C), lambda i: (i, 0)),
        compiler_params=pltpu.CompilerParams(
            dimension_semantics=("parallel",),
            vmem_limit_bytes=_VMEM_LIMIT,
        ),
    )(*taps)
    out = out[:M] if Mp != M else out
    return out.reshape(B, Ho, Wo, C)


# ----------------------------------------------------------------------------
# Deterministic synthetic parameter init (shapes follow torchvision resnet50)
# ----------------------------------------------------------------------------
def _init_conv_bn(key, kh, kw, cin, cout, concat=False):
    k1, k2, k3, k4, k5 = jax.random.split(key, 5)
    fan_in = kh * kw * cin
    w = jax.random.normal(k1, (kh * kw, cin, cout), jnp.float32) * jnp.sqrt(2.0 / fan_in)
    gamma = 1.0 + 0.1 * jax.random.normal(k2, (cout,), jnp.float32)
    beta = 0.1 * jax.random.normal(k3, (cout,), jnp.float32)
    mean = 0.1 * jax.random.normal(k4, (cout,), jnp.float32)
    var = jnp.abs(jax.random.normal(k5, (cout,), jnp.float32)) * 0.1 + 0.9
    eps = 1e-5
    scale = gamma / jnp.sqrt(var + eps)
    shift = beta - mean * scale

    # Pad K rows (per-tap Cin) and N cols to multiples of 128 ONCE, here.
    # Padded weight rows/cols are zero -> padded activation channels are inert.
    cin_p = cin if concat else _round_up(cin, 128)
    cout_p = _round_up(cout, 128)
    w_f = w * scale[None, None, :]                    # fold BN scale into W
    w_pad = jnp.zeros((kh * kw, cin_p, cout_p), jnp.float32)
    w_pad = w_pad.at[:, :cin, :cout].set(w_f)
    bias = jnp.zeros((1, cout_p), jnp.float32).at[0, :cout].set(shift)
    # NOTE: real PyTorch weights ([Cout, Cin, kh, kw]) must be permuted to
    # (kh, kw, Cin, Cout) before the fold/pad above or results will be wrong.
    return dict(
        w=w_pad.reshape(kh * kw * cin_p, cout_p).astype(jnp.bfloat16),
        bias=bias,
        kh=kh, kw=kw, concat=concat,
    )


def make_resnet50_params(key):
    keys = iter(jax.random.split(key, 256))
    params = {"stem": _init_conv_bn(next(keys), 7, 7, 3, 64, concat=True)}
    layers = []
    in_c = 64
    # (planes, num_blocks, stride) per stage — ResNet-50: [3, 4, 6, 3]
    for planes, blocks, stride in [(64, 3, 1), (128, 4, 2), (256, 6, 2), (512, 3, 2)]:
        layer = []
        for b in range(blocks):
            s = stride if b == 0 else 1
            blk = {
                "c1": _init_conv_bn(next(keys), 1, 1, in_c, planes),
                "c2": _init_conv_bn(next(keys), 3, 3, planes, planes),
                "c3": _init_conv_bn(next(keys), 1, 1, planes, planes * 4),
            }
            if b == 0:  # stride != 1 or channel change -> projection shortcut
                blk["down"] = _init_conv_bn(next(keys), 1, 1, in_c, planes * 4)
            layer.append((blk, s))
            in_c = planes * 4
        layers.append(layer)
    params["layers"] = layers
    return params


# ----------------------------------------------------------------------------
# Forward pass (== EncoderCNN.forward)
# ----------------------------------------------------------------------------
def bottleneck(x, blk, stride):
    if "down" in blk:
        identity = conv_bn(x, blk["down"], stride=stride, pad=0, relu=False)
    else:
        identity = x
    out = conv_bn(x, blk["c1"], stride=1, pad=0, relu=True)
    out = conv_bn(out, blk["c2"], stride=stride, pad=1, relu=True)   # stride on 3x3 (v1.5)
    # residual add + ReLU fused into the c3 GEMM epilogue
    out = conv_bn(out, blk["c3"], stride=1, pad=0, relu=True, residual=identity)
    return out


def encoder_cnn_forward(images_nchw, params):
    # NCHW (PyTorch) -> NHWC (TPU lane-dense channels), bf16 activations
    x = jnp.transpose(images_nchw, (0, 2, 3, 1)).astype(jnp.bfloat16)
    x = conv_bn(x, params["stem"], stride=2, pad=3, relu=True)       # conv1 + bn1 + relu
    x = maxpool_3x3_s2(x)                                            # maxpool
    for layer in params["layers"]:                                   # layer1..layer4
        for blk, s in layer:
            x = bottleneck(x, blk, s)
    B, H, W, C = x.shape
    # PyTorch: features.permute(0,2,3,1).view(B, -1, C)  -> already NHWC here
    return x.reshape(B, H * W, C).astype(jnp.float32)


# ----------------------------------------------------------------------------
if __name__ == "__main__":
    key = jax.random.PRNGKey(0)
    k_params, k_img = jax.random.split(key)

    params = make_resnet50_params(k_params)

    # Small image (64x64) -> ResNet-50 backbone downsamples by 32 -> 2x2 feature map
    images = jax.random.normal(k_img, (2, 3, 64, 64), jnp.float32)   # NCHW like PyTorch

    features = encoder_cnn_forward(images, params)
    features = jax.block_until_ready(features)

    assert features.shape == (2, 4, 2048), features.shape
    assert features.dtype == jnp.float32
    assert bool(jnp.all(jnp.isfinite(features)))

    print("KERNEL_OK")
</pallas_src>

<mosaic_0001>
module attributes {stable_mosaic.version = 11 : i64} {
  func.func @_conv_gemm_kernel(%arg0: i32, %arg1: i32, %arg2: memref<147x128xbf16, #tpu.memory_space<vmem>>, %arg3: memref<1x128xf32, #tpu.memory_space<vmem>>, %arg4: memref<256x147xbf16, #tpu.memory_space<vmem>>, %arg5: memref<256x128xbf16, #tpu.memory_space<vmem>>) attributes {dimension_semantics = [#tpu.dimension_semantics<parallel>, #tpu.dimension_semantics<parallel>], iteration_bounds = array<i64: 8, 1>, scalar_prefetch = 0 : i64, scratch_operands = 0 : i64, tpu.core_type = #tpu.core_type<tc>, window_params = [{transform_indices = @transform_0, window_bounds = array<i64: 147, 128>}, {transform_indices = @transform_1, window_bounds = array<i64: 1, 128>}, {transform_indices = @transform_2, window_bounds = array<i64: 256, 147>}, {transform_indices = @transform_3, window_bounds = array<i64: 256, 128>}]} {
    %c0 = arith.constant 0 : index
    %c0_0 = arith.constant 0 : index
    %0 = vector.load %arg4[%c0, %c0_0] : memref<256x147xbf16, #tpu.memory_space<vmem>>, vector<256x147xbf16>
    %c0_1 = arith.constant 0 : index
    %c0_2 = arith.constant 0 : index
    %1 = vector.load %arg2[%c0_1, %c0_2] : memref<147x128xbf16, #tpu.memory_space<vmem>>, vector<147x128xbf16>
    %cst = arith.constant dense<0.000000e+00> : vector<256x128xf32>
    %2 = tpu.matmul %0, %1, %cst {dimension_numbers = #tpu.dot_dimension_numbers<[1], [0], [0], [1], [0, 0, 1, 1], [], []>} : vector<256x147xbf16>, vector<147x128xbf16>, vector<256x128xf32> -> vector<256x128xf32>
    %c0_3 = arith.constant 0 : index
    %c0_4 = arith.constant 0 : index
    %3 = vector.load %arg3[%c0_3, %c0_4] : memref<1x128xf32, #tpu.memory_space<vmem>>, vector<1x128xf32>
    %4 = vector.broadcast %3 : vector<1x128xf32> to vector<256x128xf32>
    %5 = arith.addf %2, %4 : vector<256x128xf32>
    %cst_5 = arith.constant 0.000000e+00 : f32
    %6 = vector.broadcast %cst_5 : f32 to vector<256x128xf32>
    %7 = arith.maximumf %5, %6 : vector<256x128xf32>
    %8 = arith.truncf %7 : vector<256x128xf32> to vector<256x128xbf16>
    %c0_6 = arith.constant 0 : index
    %c0_7 = arith.constant 0 : index
    %9 = vector.load %arg5[%c0_6, %c0_7] : memref<256x128xbf16, #tpu.memory_space<vmem>>, vector<256x128xbf16>
    tpu.vector_store %arg5[%c0_6, %c0_7], %8 {strides = array<i32>} : memref<256x128xbf16, #tpu.memory_space<vmem>>, vector<256x128xbf16>,
    return
  }
  func.func @transform_0(%arg0: i32, %arg1: i32) -> (i32, i32) {
    %c0_i32 = arith.constant 0 : i32
    %c0_i32_0 = arith.constant 0 : i32
    return %c0_i32, %arg1 : i32, i32
  }
  func.func @transform_1(%arg0: i32, %arg1: i32) -> (i32, i32) {
    %c0_i32 = arith.constant 0 : i32
    %c0_i32_0 = arith.constant 0 : i32
    return %c0_i32, %arg1 : i32, i32
  }
  func.func @transform_2(%arg0: i32, %arg1: i32) -> (i32, i32) {
    %c0_i32 = arith.constant 0 : i32
    %c0_i32_0 = arith.constant 0 : i32
    return %arg0, %c0_i32 : i32, i32
  }
  func.func @transform_3(%arg0: i32, %arg1: i32) -> (i32, i32) {
    %c0_i32 = arith.constant 0 : i32
    return %arg0, %arg1 : i32, i32
  }
}

</mosaic_0001>

<llo_original>
// kernel: tpu_custom_call.1
$region0: #{tpu_custom_call.1}
  #allocation0 [shape = 'u32[]', space=smem, size = 0x4, offset = 0x4, fixed_abs, tag = 'smem constant byte address 0x4 - core index']
  #allocation1 [shape = 'u32[72,128]{1,0:T(1,128)}', space=vmem, size = 0x9000, scoped, tag = 'internal scratch']
  %s0 = inlined_call_operand.vmem [shape: bf16[147,128], index: 0, kind: input, shape index: {}]
  %s1 = inlined_call_operand.vmem [shape: f32[1,128], index: 1, kind: input, shape index: {}]
  %s2 = inlined_call_operand.vmem [shape: bf16[2048,147], index: 2, kind: input, shape index: {}]
  %s3 = inlined_call_operand.hbm [shape: bf16[2048,128], index: 3, kind: output, shape index: {}]
  %s4 = sld [smem:[#allocation0]]
  $region45: #{tpu_custom_call.1} parent=0
    _
  %s6 = ssub.s32 1, %s4
  %s7 = scalar_select 0, %s6, %s4
  $region1: #{tpu_custom_call.1} parent=0
    #allocation2 [shape = 'u8[131072]{0}', space=vmem, size = 0x20000, scoped, tag = 'output window, operand 0']
    #allocation3 [shape = 's32[2]{0}', space=sflag, size = 0x8, scoped, tag = 'scoped memory for tpu_custom_call.1']
    %8 = vsyncpa [#allocation3], 0
    %s9 = scalar_lea.sflag [#allocation3], 1
    %10 = vsyncpa %s9, 0
    loop: start=0, step=1, limit=10
    $region2: #{tpu_custom_call.1} parent=1 // loop_pre_header
      _
    $region3: #{tpu_custom_call.1} parent=1 // loop_header
      %s12 = sphi 0, %s16
      %p13 = scmp.ge.s32.totalorder %s12, 10
      %s19 = sphi 0, %s31
      %s20 = sphi 0, %s27
      %s21 = sphi 0, %s19
      %s22 = sphi 0, %s20
      %s23 = sphi 0, %s21
      %s24 = sphi 0, %s22
      %s34 = sphi 0, %s36
      %s37 = sphi 0, %s34
      %s38 = sphi 0, %s37
      %s54 = sphi 0, %s38
      %s60 = sphi 0, %s62
      %s63 = sphi 0, %s60
      %s64 = sphi 0, %s63
      %s80 = sphi 0, %s64
      %s86 = sphi 0, %s88
      %s89 = sphi 0, %s86
      %s90 = sphi 0, %s89
      %s106 = sphi 0, %s90
      %s114 = sphi 0, %s116
      %s117 = sphi 0, %s114
      %s118 = sphi 0, %s117
      %s134 = sphi 0, %s118
    $region4: #{tpu_custom_call.1} parent=1 // loop_header_branch
      %15 = sbr.rel (%p13) target = $region8
    $region5: #{tpu_custom_call.1} parent=1 // loop_body
      %s17 = ssub.s32 %s12, 1
      %s18 = ssub.s32 %s12, 2
      %s25 = sadd.s32 1, %s20
      %p26 = scmp.ge.s32.totalorder %s25, 1
      %s27 = scalar_select %p26, 0, %s25
      %s28 = sadd.s32 1, %s19
      %s29 = scalar_select %p26, %s28, %s19
      %p30 = scmp.ge.s32.totalorder %s29, 8
      %s31 = scalar_select %p30, 0, %s29
      %s32 = ssub.s32 %s20, %s27
      %p33 = scmp.eq.s32.totalorder %s32, 0
      %s35 = sadd.s32 %s34, 1
      %s36 = scalar_select %p33, %s34, %s35
      %p39 = pneg %p33
      %p40 = scmp.eq.s32.totalorder %s12, 7
      %p41 = por %p39, %p40
      %p42 = scmp.ne.s32.totalorder %s34, %s37
      %p43 = scmp.eq.s32.totalorder %s12, 0
      %p44 = por %p42, %p43
      %p45 = scmp.ne.s32.totalorder %s34, %s37
      %p46 = scmp.eq.s32.totalorder %s17, 7
      %p47 = por %p45, %p46
      %p48 = scmp.ne.s32.totalorder %s37, %s38
      %p49 = scmp.eq.s32.totalorder %s17, 0
      %p50 = por %p48, %p49
      %p51 = scmp.ne.s32.totalorder %s37, %s38
      %p52 = scmp.eq.s32.totalorder %s18, 7
      %p53 = por %p51, %p52
      %p55 = scmp.ne.s32.totalorder %s38, %s54
      %p56 = scmp.eq.s32.totalorder %s18, 0
      %p57 = por %p55, %p56
      %s58 = ssub.s32 %s20, %s27
      %p59 = scmp.eq.s32.totalorder %s58, 0
      %s61 = sadd.s32 %s60, 1
      %s62 = scalar_select %p59, %s60, %s61
      %p65 = pneg %p59
      %p66 = scmp.eq.s32.totalorder %s12, 7
      %p67 = por %p65, %p66
      %p68 = scmp.ne.s32.totalorder %s60, %s63
      %p69 = scmp.eq.s32.totalorder %s12, 0
      %p70 = por %p68, %p69
      %p71 = scmp.ne.s32.totalorder %s60, %s63
      %p72 = scmp.eq.s32.totalorder %s17, 7
      %p73 = por %p71, %p72
      %p74 = scmp.ne.s32.totalorder %s63, %s64
      %p75 = scmp.eq.s32.totalorder %s17, 0
      %p76 = por %p74, %p75
      %p77 = scmp.ne.s32.totalorder %s63, %s64
      %p78 = scmp.eq.s32.totalorder %s18, 7
      %p79 = por %p77, %p78
      %p81 = scmp.ne.s32.totalorder %s64, %s80
      %p82 = scmp.eq.s32.totalorder %s18, 0
      %p83 = por %p81, %p82
      %s84 = ssub.s32 %s19, %s31
      %p85 = scmp.eq.s32.totalorder %s84, 0
      %s87 = sadd.s32 %s86, 1
      %s88 = scalar_select %p85, %s86, %s87
      %p91 = pneg %p85
      %p92 = scmp.eq.s32.totalorder %s12, 7
      %p93 = por %p91, %p92
      %p94 = scmp.ne.s32.totalorder %s86, %s89
      %p95 = scmp.eq.s32.totalorder %s12, 0
      %p96 = por %p94, %p95
      %p97 = scmp.ne.s32.totalorder %s86, %s89
      %p98 = scmp.eq.s32.totalorder %s17, 7
      %p99 = por %p97, %p98
      %p100 = scmp.ne.s32.totalorder %s89, %s90
      %p101 = scmp.eq.s32.totalorder %s17, 0
      %p102 = por %p100, %p101
      %p103 = scmp.ne.s32.totalorder %s89, %s90
      %p104 = scmp.eq.s32.totalorder %s18, 7
      %p105 = por %p103, %p104
      %p107 = scmp.ne.s32.totalorder %s90, %s106
      %p108 = scmp.eq.s32.totalorder %s18, 0
      %p109 = por %p107, %p108
      %s110 = ssub.s32 %s19, %s31
      %s111 = ssub.s32 %s20, %s27
      %s112 = sor.u32 %s110, %s111
      %p113 = scmp.eq.s32.totalorder %s112, 0
      %s115 = sadd.s32 %s114, 1
      %s116 = scalar_select %p113, %s114, %s115
      %p119 = pneg %p113
      %p120 = scmp.eq.s32.totalorder %s12, 7
      %p121 = por %p119, %p120
      %p122 = scmp.ne.s32.totalorder %s114, %s117
      %p123 = scmp.eq.s32.totalorder %s12, 0
      %p124 = por %p122, %p123
      %p125 = scmp.ne.s32.totalorder %s114, %s117
      %p126 = scmp.eq.s32.totalorder %s17, 7
      %p127 = por %p125, %p126
      %p128 = scmp.ne.s32.totalorder %s117, %s118
      %p129 = scmp.eq.s32.totalorder %s17, 0
      %p130 = por %p128, %p129
      %p131 = scmp.ne.s32.totalorder %s117, %s118
      %p132 = scmp.eq.s32.totalorder %s18, 7
      %p133 = por %p131, %p132
      %p135 = scmp.ne.s32.totalorder %s118, %s134
      %p136 = scmp.eq.s32.totalorder %s18, 0
      %p137 = por %p135, %p136
      %p138 = scmp.le.s32.totalorder 1, %s12
      %p139 = scmp.lt.s32.totalorder %s12, 9
      %p140 = pnand %p138, %p139
      %p141 = pneg %p140
      // Predicated region
      $region9: #{tpu_custom_call.1} parent=5 // pred_check
        _
      $region10: #{tpu_custom_call.1} parent=5 // pred_check_branch
        %143 = sbr.rel (%p140) target = $region12
      $region11: #{tpu_custom_call.1} parent=5 // pred_region
        %s144 = ssub.s32 %s12, 1
        // Predicated region
        $region13: #{tpu_custom_call.1} parent=11 // pred_check
          %p145 = pneg %p50
        $region14: #{tpu_custom_call.1} parent=11 // pred_check_branch
          %147 = sbr.rel (%p145) target = $region16
        $region15: #{tpu_custom_call.1} parent=11 // pred_region
          %p148 = scmp.lt.s32.totalorder %s22, 0
          %s149 = scalar_select %p148, %s22, 0
          %s150 = smul.addr %s149, 4
          %s151 = scalar_lea.vmem %s0, %s150
        $region16: #{tpu_custom_call.1} parent=11 // pred_fallthru
          _
        // Predicated region
        $region17: #{tpu_custom_call.1} parent=11 // pred_check
          %p152 = pneg %p76
        $region18: #{tpu_custom_call.1} parent=11 // pred_check_branch
          %154 = sbr.rel (%p152) target = $region20
        $region19: #{tpu_custom_call.1} parent=11 // pred_region
          %p155 = scmp.lt.s32.totalorder %s22, 0
          %s156 = scalar_select %p155, %s22, 0
          %s157 = scalar_lea.vmem %s1, %s156
        $region20: #{tpu_custom_call.1} parent=11 // pred_fallthru
          _
      $region12: #{tpu_custom_call.1} parent=5 // pred_fallthru
        _
      %p158 = scmp.lt.s32.totalorder %s12, 8
      // Predicated region
      $region21: #{tpu_custom_call.1} parent=5 // pred_check
        %p159 = pneg %p158
      $region22: #{tpu_custom_call.1} parent=5 // pred_check_branch
        %161 = sbr.rel (%p159) target = $region24
      $region23: #{tpu_custom_call.1} parent=5 // pred_region
        // Predicated region
        $region25: #{tpu_custom_call.1} parent=23 // pred_check
          %p162 = pneg %p96
        $region26: #{tpu_custom_call.1} parent=23 // pred_check_branch
          %164 = sbr.rel (%p162) target = $region28
        $region27: #{tpu_custom_call.1} parent=23 // pred_region
          %s165 = smul.u32 32, %s19
          %p166 = scmp.lt.s32.totalorder %s165, 255
          %s167 = scalar_select %p166, %s165, 255
          %s168 = smul.addr %s167, 2
          %s169 = smul.addr %s168, 4
          %s170 = scalar_lea.vmem %s2, %s169
          %s171 = smul.u32 32, %s19
        $region28: #{tpu_custom_call.1} parent=23 // pred_fallthru
          _
      $region24: #{tpu_custom_call.1} parent=5 // pred_fallthru
        _
      %p172 = scmp.le.s32.totalorder 1, %s12
      %p173 = scmp.lt.s32.totalorder %s12, 9
      %p174 = pnand %p172, %p173
      %p175 = pneg %p174
      // Predicated region
      $region29: #{tpu_custom_call.1} parent=5 // pred_check
        _
      $region30: #{tpu_custom_call.1} parent=5 // pred_check_branch
        %177 = sbr.rel (%p174) target = $region32
      $region31: #{tpu_custom_call.1} parent=5 // pred_region
        %s178 = ssub.s32 %s12, 1
        %p179 = scmp.lt.s32.totalorder %s22, 0
        %s180 = scalar_select %p179, %s22, 0
        %s181 = smul.addr %s180, 4
        %s182 = scalar_lea.vmem %s0, %s181
        %p183 = pneg %p50
        %p184 = pneg %p47
        %p185 = scmp.lt.s32.totalorder %s22, 0
        %s186 = scalar_select %p185, %s22, 0
        %s187 = scalar_lea.vmem %s1, %s186
        %p188 = pneg %p76
        %p189 = pneg %p73
        %s190 = smul.u32 32, %s21
        %p191 = scmp.lt.s32.totalorder %s190, 255
        %s192 = scalar_select %p191, %s190, 255
        %s193 = smul.addr %s192, 2
        %s194 = smul.addr %s193, 4
        %s195 = scalar_lea.vmem %s2, %s194
        %p196 = pneg %p102
        %p197 = pneg %p99
        %p198 = pneg %p130
        %p199 = pneg %p127
        %s200 = sand.u32 %s117, 1
        %s201 = scalar_lea.sflag [#allocation3], %s200
        %s202 = sand.u32 %s117, 1
        %s203 = smul.addr %s202, 128
        %s204 = scalar_lea.vmem [#allocation2], %s203
        %p205 = scmp.lt.s32.totalorder %s22, 0
        %s206 = scalar_select %p205, %s22, 0
        %s207 = smul.addr %s206, 4
        %s208 = scalar_lea.vmem %s0, %s207
        %p209 = scmp.lt.s32.totalorder %s22, 0
        %s210 = scalar_select %p209, %s22, 0
        %s211 = scalar_lea.vmem %s1, %s210
        %s212 = smul.u32 32, %s21
        %p213 = scmp.lt.s32.totalorder %s212, 255
        %s214 = scalar_select %p213, %s212, 255
        %s215 = smul.addr %s214, 2
        %s216 = smul.addr %s215, 4
        %s217 = scalar_lea.vmem %s2, %s216
        %s218 = smul.u32 32, %s21
        %s219 = smul.u32 32, %s21
        %v221 = vld [vmem:[%s217] sm:$0xff]
        %v222 = vld [vmem:[%s217 + $0x8] sm:$0xff]
        %v223 = vld [vmem:[%s217 + $0x10] sm:$0xff]
        %v224 = vld [vmem:[%s217 + $0x18] sm:$0xff]
        %v225 = vld [vmem:[%s217 + $0x20] sm:$0xff]
        %v226 = vld [vmem:[%s217 + $0x28] sm:$0xff]
        %v227 = vld [vmem:[%s217 + $0x30] sm:$0xff]
        %v228 = vld [vmem:[%s217 + $0x38] sm:$0xff]
        %v229 = vld [vmem:[%s217 + $0x40] sm:$0xff]
        %v230 = vld [vmem:[%s217 + $0x48] sm:$0xff]
        %v231 = vld [vmem:[%s217 + $0x50] sm:$0xff]
        %v232 = vld [vmem:[%s217 + $0x58] sm:$0xff]
        %v233 = vld [vmem:[%s217 + $0x60] sm:$0xff]
        %v234 = vld [vmem:[%s217 + $0x68] sm:$0xff]
        %v235 = vld [vmem:[%s217 + $0x70] sm:$0xff]
        %v236 = vld [vmem:[%s217 + $0x78] sm:$0xff]
        %v237 = vld [vmem:[%s217 + $0x80] sm:$0xff]
        %v238 = vld [vmem:[%s217 + $0x88] sm:$0xff]
        %v239 = vld [vmem:[%s217 + $0x90] sm:$0xff]
        %v240 = vld [vmem:[%s217 + $0x98] sm:$0xff]
        %v241 = vld [vmem:[%s217 + $0xa0] sm:$0xff]
        %v242 = vld [vmem:[%s217 + $0xa8] sm:$0xff]
        %v243 = vld [vmem:[%s217 + $0xb0] sm:$0xff]
        %v244 = vld [vmem:[%s217 + $0xb8] sm:$0xff]
        %v245 = vld [vmem:[%s217 + $0xc0] sm:$0xff]
        %v246 = vld [vmem:[%s217 + $0xc8] sm:$0xff]
        %v247 = vld [vmem:[%s217 + $0xd0] sm:$0xff]
        %v248 = vld [vmem:[%s217 + $0xd8] sm:$0xff]
        %v249 = vld [vmem:[%s217 + $0xe0] sm:$0xff]
        %v250 = vld [vmem:[%s217 + $0xe8] sm:$0xff]
        %v251 = vld [vmem:[%s217 + $0xf0] sm:$0xff]
        %v252 = vld [vmem:[%s217 + $0xf8] sm:$0xff]
        %v253 = vld [vmem:[%s208] sm:$0xf]
        %v254 = vld [vmem:[%s208 + $0x4] sm:$0xf]
        %v255 = vld [vmem:[%s208 + $0x8] sm:$0xf]
        %v256 = vld [vmem:[%s208 + $0xc] sm:$0xf]
        %v257 = vld [vmem:[%s208 + $0x10] sm:$0xf]
        %v258 = vld [vmem:[%s208 + $0x14] sm:$0xf]
        %v259 = vld [vmem:[%s208 + $0x18] sm:$0xf]
        %v260 = vld [vmem:[%s208 + $0x1c] sm:$0xf]
        %v261 = vld [vmem:[%s208 + $0x20] sm:$0xf]
        %v262 = vld [vmem:[%s208 + $0x24] sm:$0xf]
        %v263 = vld [vmem:[%s208 + $0x28] sm:$0xf]
        %v264 = vld [vmem:[%s208 + $0x2c] sm:$0xf]
        %v265 = vld [vmem:[%s208 + $0x30] sm:$0xf]
        %v266 = vld [vmem:[%s208 + $0x34] sm:$0xf]
        %v267 = vld [vmem:[%s208 + $0x38] sm:$0xf]
        %v268 = vld [vmem:[%s208 + $0x3c] sm:$0xf]
        %v269 = vld [vmem:[%s208 + $0x40] sm:$0xf]
        %v270 = vld [vmem:[%s208 + $0x44] sm:$0xf]
        %v271 = vld [vmem:[%s208 + $0x48] sm:$0x3]
        %v272 = vld [vmem:[%s211] sm:$0x1]
        %v274 = vperm.slane %v272, 0
        %v308 = vunpack.c.l.b16 %v221
        %v309 = vunpack.c.h.b16 %v221
        %v310 = vunpack.c.l.b16 %v222
        %v311 = vunpack.c.h.b16 %v222
        %v312 = vunpack.c.l.b16 %v223
        %v313 = vunpack.c.h.b16 %v223
        %v314 = vunpack.c.l.b16 %v224
        %v315 = vunpack.c.h.b16 %v224
        %v316 = vunpack.c.l.b16 %v225
        %v317 = vunpack.c.h.b16 %v225
        %v318 = vunpack.c.l.b16 %v226
        %v319 = vunpack.c.h.b16 %v226
        %v320 = vunpack.c.l.b16 %v227
        %v321 = vunpack.c.h.b16 %v227
        %v322 = vunpack.c.l.b16 %v228
        %v323 = vunpack.c.h.b16 %v228
        %v324 = vunpack.c.l.b16 %v229
        %v325 = vunpack.c.h.b16 %v229
        %v326 = vunpack.c.l.b16 %v230
        %v327 = vunpack.c.h.b16 %v230
        %v328 = vunpack.c.l.b16 %v231
        %v329 = vunpack.c.h.b16 %v231
        %v330 = vunpack.c.l.b16 %v232
        %v331 = vunpack.c.h.b16 %v232
        %v332 = vunpack.c.l.b16 %v233
        %v333 = vunpack.c.h.b16 %v233
        %v334 = vunpack.c.l.b16 %v234
        %v335 = vunpack.c.h.b16 %v234
        %v336 = vunpack.c.l.b16 %v235
        %v337 = vunpack.c.h.b16 %v235
        %v338 = vunpack.c.l.b16 %v236
        %v339 = vunpack.c.h.b16 %v236
        %v340 = vunpack.c.l.b16 %v237
        %v341 = vunpack.c.h.b16 %v237
        %v342 = vunpack.c.l.b16 %v238
        %v343 = vunpack.c.h.b16 %v238
        %v344 = vunpack.c.l.b16 %v239
        %v345 = vunpack.c.h.b16 %v239
        %v346 = vunpack.c.l.b16 %v240
        %v347 = vunpack.c.h.b16 %v240
        %v348 = vunpack.c.l.b16 %v241
        %v349 = vunpack.c.h.b16 %v241
        %v350 = vunpack.c.l.b16 %v242
        %v351 = vunpack.c.h.b16 %v242
        %v352 = vunpack.c.l.b16 %v243
        %v353 = vunpack.c.h.b16 %v243
        %v354 = vunpack.c.l.b16 %v244
        %v355 = vunpack.c.h.b16 %v244
        %v356 = vunpack.c.l.b16 %v245
        %v357 = vunpack.c.h.b16 %v245
        %v358 = vunpack.c.l.b16 %v246
        %v359 = vunpack.c.h.b16 %v246
        %v360 = vunpack.c.l.b16 %v247
        %v361 = vunpack.c.h.b16 %v247
        %v362 = vunpack.c.l.b16 %v248
        %v363 = vunpack.c.h.b16 %v248
        %v364 = vunpack.c.l.b16 %v249
        %v365 = vunpack.c.h.b16 %v249
        %v366 = vunpack.c.l.b16 %v250
        %v367 = vunpack.c.h.b16 %v250
        %v368 = vunpack.c.l.b16 %v251
        %v369 = vunpack.c.h.b16 %v251
        %v370 = vunpack.c.l.b16 %v252
        %v371 = vunpack.c.h.b16 %v252
        %v372 = vpack.c.b16 %v310, %v308
        %v373 = vpack.c.b16 %v311, %v309
        %v374 = vpack.c.b16 %v314, %v312
        %v375 = vpack.c.b16 %v315, %v313
        %v376 = vpack.c.b16 %v318, %v316
        %v377 = vpack.c.b16 %v319, %v317
        %v378 = vpack.c.b16 %v322, %v320
        %v379 = vpack.c.b16 %v323, %v321
        %v380 = vpack.c.b16 %v326, %v324
        %v381 = vpack.c.b16 %v327, %v325
        %v382 = vpack.c.b16 %v330, %v328
        %v383 = vpack.c.b16 %v331, %v329
        %v384 = vpack.c.b16 %v334, %v332
        %v385 = vpack.c.b16 %v335, %v333
        %v386 = vpack.c.b16 %v338, %v336
        %v387 = vpack.c.b16 %v339, %v337
        %v388 = vpack.c.b16 %v342, %v340
        %v389 = vpack.c.b16 %v343, %v341
        %v390 = vpack.c.b16 %v346, %v344
        %v391 = vpack.c.b16 %v347, %v345
        %v392 = vpack.c.b16 %v350, %v348
        %v393 = vpack.c.b16 %v351, %v349
        %v394 = vpack.c.b16 %v354, %v352
        %v395 = vpack.c.b16 %v355, %v353
        %v396 = vpack.c.b16 %v358, %v356
        %v397 = vpack.c.b16 %v359, %v357
        %v398 = vpack.c.b16 %v362, %v360
        %v399 = vpack.c.b16 %v363, %v361
        %v400 = vpack.c.b16 %v366, %v364
        %v401 = vpack.c.b16 %v367, %v365
        %v402 = vpack.c.b16 %v370, %v368
        %v403 = vpack.c.b16 %v371, %v369
        %v439 = vunpack.c.l.b16 %v253
        %v440 = vunpack.c.l.b16 %v254
        %v441 = vunpack.c.l.b16 %v255
        %v442 = vunpack.c.l.b16 %v256
        %v443 = vunpack.c.l.b16 %v257
        %v444 = vunpack.c.l.b16 %v258
        %v445 = vunpack.c.l.b16 %v259
        %v446 = vunpack.c.l.b16 %v260
        %v447 = vunpack.c.l.b16 %v261
        %v448 = vunpack.c.l.b16 %v262
        %v449 = vunpack.c.l.b16 %v263
        %v450 = vunpack.c.l.b16 %v264
        %v451 = vunpack.c.l.b16 %v265
        %v452 = vunpack.c.l.b16 %v266
        %v453 = vunpack.c.l.b16 %v267
        %v454 = vunpack.c.l.b16 %v268
        %v455 = vunpack.c.l.b16 %v269
        %v456 = vunpack.c.l.b16 %v270
        %v457 = vunpack.c.l.b16 %v271
        %v458 = vpack.c.b16 %v440, %v439
        %v459 = vpack.c.b16 %v442, %v441
        %v460 = vpack.c.b16 %v444, %v443
        %v461 = vpack.c.b16 %v446, %v445
        %v462 = vpack.c.b16 %v448, %v447
        %v463 = vpack.c.b16 %v450, %v449
        %v464 = vpack.c.b16 %v452, %v451
        %v465 = vpack.c.b16 %v454, %v453
        %v466 = vpack.c.b16 %v456, %v455
        %v467 = vpack.c.b16 %v457, %v457
        %vm477 = vcmask 154624
        %v479 = vsel %vm477, %v373, 0
        %v482 = vsel %vm477, %v375, 0
        %v485 = vsel %vm477, %v377, 0
        %v488 = vsel %vm477, %v379, 0
        %v491 = vsel %vm477, %v381, 0
        %v494 = vsel %vm477, %v383, 0
        %v497 = vsel %vm477, %v385, 0
        %v500 = vsel %vm477, %v387, 0
        %v503 = vsel %vm477, %v389, 0
        %v506 = vsel %vm477, %v391, 0
        %v509 = vsel %vm477, %v393, 0
        %v512 = vsel %vm477, %v395, 0
        %v515 = vsel %vm477, %v397, 0
        %v518 = vsel %vm477, %v399, 0
        %v521 = vsel %vm477, %v401, 0
        %v524 = vsel %vm477, %v403, 0
        %vm526 = vcmask 1040384
        %vm527 = vcmask 1041408
        %v528 = vsel %vm526, 4294967295, 65535
        %v529 = vsel %vm527, %v528, 0
        %v531 = vand.u32 %v467, %v529
        %533 = vmatpush.bf16.msra.mxu0 %v465
        %534 = vmatpush.bf16.msra.mxu0 %v464
        %535 = vmatpush.bf16.msra.mxu0 %v463
        %536 = vmatpush.bf16.msra.mxu0 %v462
        %537 = vmatpush.bf16.msra.mxu0 %v461
        %538 = vmatpush.bf16.msra.mxu0 %v460
        %539 = vmatpush.bf16.msra.mxu0 %v459
        %540 = vmatpush.bf16.msra.mxu0 %v458
        %541 = vmatmul.bf16.gmra.mxu0 %v372
        %v542 = vpop.f32.mrf.mxu0
        %v543 = vadd.f32 %v274, %v542
        %v544 = vpop.f32.mrf.mxu0
        %v545 = vadd.f32 %v274, %v544
        %546 = vmatmul.bf16.gmra.mxu0 %v374
        %v547 = vpop.f32.mrf.mxu0
        %v548 = vadd.f32 %v274, %v547
        %v549 = vpop.f32.mrf.mxu0
        %v550 = vadd.f32 %v274, %v549
        %551 = vmatmul.bf16.gmra.mxu0 %v376
        %v552 = vpop.f32.mrf.mxu0
        %v553 = vadd.f32 %v274, %v552
        %v554 = vpop.f32.mrf.mxu0
        %v555 = vadd.f32 %v274, %v554
        %556 = vmatmul.bf16.gmra.mxu0 %v378
        %v557 = vpop.f32.mrf.mxu0
        %v558 = vadd.f32 %v274, %v557
        %v559 = vpop.f32.mrf.mxu0
        %v560 = vadd.f32 %v274, %v559
        %561 = vmatmul.bf16.gmra.mxu0 %v380
        %v562 = vpop.f32.mrf.mxu0
        %v563 = vadd.f32 %v274, %v562
        %v564 = vpop.f32.mrf.mxu0
        %v565 = vadd.f32 %v274, %v564
        %566 = vmatmul.bf16.gmra.mxu0 %v382
        %v567 = vpop.f32.mrf.mxu0
        %v568 = vadd.f32 %v274, %v567
        %v569 = vpop.f32.mrf.mxu0
        %v570 = vadd.f32 %v274, %v569
        %571 = vmatmul.bf16.gmra.mxu0 %v384
        %v572 = vpop.f32.mrf.mxu0
        %v573 = vadd.f32 %v274, %v572
        %v574 = vpop.f32.mrf.mxu0
        %v575 = vadd.f32 %v274, %v574
        %576 = vmatmul.bf16.gmra.mxu0 %v386
        %v577 = vpop.f32.mrf.mxu0
        %v578 = vadd.f32 %v274, %v577
        %v579 = vpop.f32.mrf.mxu0
        %v580 = vadd.f32 %v274, %v579
        %581 = vmatmul.bf16.gmra.mxu0 %v388
        %v582 = vpop.f32.mrf.mxu0
        %v583 = vadd.f32 %v274, %v582
        %v584 = vpop.f32.mrf.mxu0
        %v585 = vadd.f32 %v274, %v584
        %586 = vmatmul.bf16.gmra.mxu0 %v390
        %v587 = vpop.f32.mrf.mxu0
        %v588 = vadd.f32 %v274, %v587
        %v589 = vpop.f32.mrf.mxu0
        %v590 = vadd.f32 %v274, %v589
        %591 = vmatmul.bf16.gmra.mxu0 %v392
        %v592 = vpop.f32.mrf.mxu0
        %v593 = vadd.f32 %v274, %v592
        %v594 = vpop.f32.mrf.mxu0
        %v595 = vadd.f32 %v274, %v594
        %596 = vmatmul.bf16.gmra.mxu0 %v394
        %v597 = vpop.f32.mrf.mxu0
        %v598 = vadd.f32 %v274, %v597
        %v599 = vpop.f32.mrf.mxu0
        %v600 = vadd.f32 %v274, %v599
        %601 = vmatmul.bf16.gmra.mxu0 %v396
        %v602 = vpop.f32.mrf.mxu0
        %v603 = vadd.f32 %v274, %v602
        %v604 = vpop.f32.mrf.mxu0
        %v605 = vadd.f32 %v274, %v604
        %606 = vmatmul.bf16.gmra.mxu0 %v398
        %v607 = vpop.f32.mrf.mxu0
        %v608 = vadd.f32 %v274, %v607
        %v609 = vpop.f32.mrf.mxu0
        %v610 = vadd.f32 %v274, %v609
        %611 = vmatmul.bf16.gmra.mxu0 %v400
        %v612 = vpop.f32.mrf.mxu0
        %v613 = vadd.f32 %v274, %v612
        %v614 = vpop.f32.mrf.mxu0
        %v615 = vadd.f32 %v274, %v614
        %616 = vmatmul.bf16.gmra.mxu0 %v402
        %v617 = vpop.f32.mrf.mxu0
        %v618 = vadd.f32 %v274, %v617
        %v619 = vpop.f32.mrf.mxu0
        %v620 = vadd.f32 %v274, %v619
        %621 = vdwg.mxu0
        %622 = vmatpush.bf16.msra.mxu0 0
        %623 = vmatpush.bf16.msra.mxu0 0
        %624 = vmatpush.bf16.msra.mxu0 0
        %625 = vmatpush.bf16.msra.mxu0 0
        %626 = vmatpush.bf16.msra.mxu0 0
        %627 = vmatpush.bf16.msra.mxu0 0
        %628 = vmatpush.bf16.msra.mxu0 %v531
        %629 = vmatpush.bf16.msra.mxu0 %v466
        %630 = vmatmul.bf16.gmra.mxu0 %v479
        %v631 = vpop.f32.mrf.mxu0
        %v632 = vadd.f32 %v543, %v631
        %v633 = vpop.f32.mrf.mxu0
        %v634 = vadd.f32 %v545, %v633
        %635 = vmatmul.bf16.gmra.mxu0 %v482
        %v636 = vpop.f32.mrf.mxu0
        %v637 = vadd.f32 %v548, %v636
        %v638 = vpop.f32.mrf.mxu0
        %v639 = vadd.f32 %v550, %v638
        %640 = vmatmul.bf16.gmra.mxu0 %v485
        %v641 = vpop.f32.mrf.mxu0
        %v642 = vadd.f32 %v553, %v641
        %v643 = vpop.f32.mrf.mxu0
        %v644 = vadd.f32 %v555, %v643
        %645 = vmatmul.bf16.gmra.mxu0 %v488
        %v646 = vpop.f32.mrf.mxu0
        %v647 = vadd.f32 %v558, %v646
        %v648 = vpop.f32.mrf.mxu0
        %v649 = vadd.f32 %v560, %v648
        %650 = vmatmul.bf16.gmra.mxu0 %v491
        %v651 = vpop.f32.mrf.mxu0
        %v652 = vadd.f32 %v563, %v651
        %v653 = vpop.f32.mrf.mxu0
        %v654 = vadd.f32 %v565, %v653
        %655 = vmatmul.bf16.gmra.mxu0 %v494
        %v656 = vpop.f32.mrf.mxu0
        %v657 = vadd.f32 %v568, %v656
        %v658 = vpop.f32.mrf.mxu0
        %v659 = vadd.f32 %v570, %v658
        %660 = vmatmul.bf16.gmra.mxu0 %v497
        %v661 = vpop.f32.mrf.mxu0
        %v662 = vadd.f32 %v573, %v661
        %v663 = vpop.f32.mrf.mxu0
        %v664 = vadd.f32 %v575, %v663
        %665 = vmatmul.bf16.gmra.mxu0 %v500
        %v666 = vpop.f32.mrf.mxu0
        %v667 = vadd.f32 %v578, %v666
        %v668 = vpop.f32.mrf.mxu0
        %v669 = vadd.f32 %v580, %v668
        %670 = vmatmul.bf16.gmra.mxu0 %v503
        %v671 = vpop.f32.mrf.mxu0
        %v672 = vadd.f32 %v583, %v671
        %v673 = vpop.f32.mrf.mxu0
        %v674 = vadd.f32 %v585, %v673
        %675 = vmatmul.bf16.gmra.mxu0 %v506
        %v676 = vpop.f32.mrf.mxu0
        %v677 = vadd.f32 %v588, %v676
        %v678 = vpop.f32.mrf.mxu0
        %v679 = vadd.f32 %v590, %v678
        %680 = vmatmul.bf16.gmra.mxu0 %v509
        %v681 = vpop.f32.mrf.mxu0
        %v682 = vadd.f32 %v593, %v681
        %v683 = vpop.f32.mrf.mxu0
        %v684 = vadd.f32 %v595, %v683
        %685 = vmatmul.bf16.gmra.mxu0 %v512
        %v686 = vpop.f32.mrf.mxu0
        %v687 = vadd.f32 %v598, %v686
        %v688 = vpop.f32.mrf.mxu0
        %v689 = vadd.f32 %v600, %v688
        %690 = vmatmul.bf16.gmra.mxu0 %v515
        %v691 = vpop.f32.mrf.mxu0
        %v692 = vadd.f32 %v603, %v691
        %v693 = vpop.f32.mrf.mxu0
        %v694 = vadd.f32 %v605, %v693
        %695 = vmatmul.bf16.gmra.mxu0 %v518
        %v696 = vpop.f32.mrf.mxu0
        %v697 = vadd.f32 %v608, %v696
        %v698 = vpop.f32.mrf.mxu0
        %v699 = vadd.f32 %v610, %v698
        %700 = vmatmul.bf16.gmra.mxu0 %v521
        %v701 = vpop.f32.mrf.mxu0
        %v702 = vadd.f32 %v613, %v701
        %v703 = vpop.f32.mrf.mxu0
        %v704 = vadd.f32 %v615, %v703
        %705 = vmatmul.bf16.gmra.mxu0 %v524
        %v706 = vpop.f32.mrf.mxu0
        %v707 = vadd.f32 %v618, %v706
        %v708 = vpop.f32.mrf.mxu0
        %v709 = vadd.f32 %v620, %v708
        %710 = vdwg.mxu0
        %v711 = vmax.f32 %v632, 0.0
        %v712 = vmax.f32 %v634, 0.0
        %v713 = vmax.f32 %v637, 0.0
        %v714 = vmax.f32 %v639, 0.0
        %v715 = vmax.f32 %v642, 0.0
        %v716 = vmax.f32 %v644, 0.0
        %v717 = vmax.f32 %v647, 0.0
        %v718 = vmax.f32 %v649, 0.0
        %v719 = vmax.f32 %v652, 0.0
        %v720 = vmax.f32 %v654, 0.0
        %v721 = vmax.f32 %v657, 0.0
        %v722 = vmax.f32 %v659, 0.0
        %v723 = vmax.f32 %v662, 0.0
        %v724 = vmax.f32 %v664, 0.0
        %v725 = vmax.f32 %v667, 0.0
        %v726 = vmax.f32 %v669, 0.0
        %v727 = vmax.f32 %v672, 0.0
        %v728 = vmax.f32 %v674, 0.0
        %v729 = vmax.f32 %v677, 0.0
        %v730 = vmax.f32 %v679, 0.0
        %v731 = vmax.f32 %v682, 0.0
        %v732 = vmax.f32 %v684, 0.0
        %v733 = vmax.f32 %v687, 0.0
        %v734 = vmax.f32 %v689, 0.0
        %v735 = vmax.f32 %v692, 0.0
        %v736 = vmax.f32 %v694, 0.0
        %v737 = vmax.f32 %v697, 0.0
        %v738 = vmax.f32 %v699, 0.0
        %v739 = vmax.f32 %v702, 0.0
        %v740 = vmax.f32 %v704, 0.0
        %v741 = vmax.f32 %v707, 0.0
        %v742 = vmax.f32 %v709, 0.0
        %v743 = vpack.c.bf16 %v711, %v711
        %v744 = vpack.c.bf16 %v712, %v712
        %v745 = vpack.c.bf16 %v713, %v713
        %v746 = vpack.c.bf16 %v714, %v714
        %v747 = vpack.c.bf16 %v715, %v715
        %v748 = vpack.c.bf16 %v716, %v716
        %v749 = vpack.c.bf16 %v717, %v717
        %v750 = vpack.c.bf16 %v718, %v718
        %v751 = vpack.c.bf16 %v719, %v719
        %v752 = vpack.c.bf16 %v720, %v720
        %v753 = vpack.c.bf16 %v721, %v721
        %v754 = vpack.c.bf16 %v722, %v722
        %v755 = vpack.c.bf16 %v723, %v723
        %v756 = vpack.c.bf16 %v724, %v724
        %v757 = vpack.c.bf16 %v725, %v725
        %v758 = vpack.c.bf16 %v726, %v726
        %v759 = vpack.c.bf16 %v727, %v727
        %v760 = vpack.c.bf16 %v728, %v728
        %v761 = vpack.c.bf16 %v729, %v729
        %v762 = vpack.c.bf16 %v730, %v730
        %v763 = vpack.c.bf16 %v731, %v731
        %v764 = vpack.c.bf16 %v732, %v732
        %v765 = vpack.c.bf16 %v733, %v733
        %v766 = vpack.c.bf16 %v734, %v734
        %v767 = vpack.c.bf16 %v735, %v735
        %v768 = vpack.c.bf16 %v736, %v736
        %v769 = vpack.c.bf16 %v737, %v737
        %v770 = vpack.c.bf16 %v738, %v738
        %v771 = vpack.c.bf16 %v739, %v739
        %v772 = vpack.c.bf16 %v740, %v740
        %v773 = vpack.c.bf16 %v741, %v741
        %v774 = vpack.c.bf16 %v742, %v742
        %775 = vst [vmem:[%s204] sm:$0xf] %v743
        %776 = vst [vmem:[%s204 + $0x4] sm:$0xf] %v744
        %777 = vst [vmem:[%s204 + $0x8] sm:$0xf] %v745
        %778 = vst [vmem:[%s204 + $0xc] sm:$0xf] %v746
        %779 = vst [vmem:[%s204 + $0x10] sm:$0xf] %v747
        %780 = vst [vmem:[%s204 + $0x14] sm:$0xf] %v748
        %781 = vst [vmem:[%s204 + $0x18] sm:$0xf] %v749
        %782 = vst [vmem:[%s204 + $0x1c] sm:$0xf] %v750
        %783 = vst [vmem:[%s204 + $0x20] sm:$0xf] %v751
        %784 = vst [vmem:[%s204 + $0x24] sm:$0xf] %v752
        %785 = vst [vmem:[%s204 + $0x28] sm:$0xf] %v753
        %786 = vst [vmem:[%s204 + $0x2c] sm:$0xf] %v754
        %787 = vst [vmem:[%s204 + $0x30] sm:$0xf] %v755
        %788 = vst [vmem:[%s204 + $0x34] sm:$0xf] %v756
        %789 = vst [vmem:[%s204 + $0x38] sm:$0xf] %v757
        %790 = vst [vmem:[%s204 + $0x3c] sm:$0xf] %v758
        %791 = vst [vmem:[%s204 + $0x40] sm:$0xf] %v759
        %792 = vst [vmem:[%s204 + $0x44] sm:$0xf] %v760
        %793 = vst [vmem:[%s204 + $0x48] sm:$0xf] %v761
        %794 = vst [vmem:[%s204 + $0x4c] sm:$0xf] %v762
        %795 = vst [vmem:[%s204 + $0x50] sm:$0xf] %v763
        %796 = vst [vmem:[%s204 + $0x54] sm:$0xf] %v764
        %797 = vst [vmem:[%s204 + $0x58] sm:$0xf] %v765
        %798 = vst [vmem:[%s204 + $0x5c] sm:$0xf] %v766
        %799 = vst [vmem:[%s204 + $0x60] sm:$0xf] %v767
        %800 = vst [vmem:[%s204 + $0x64] sm:$0xf] %v768
        %801 = vst [vmem:[%s204 + $0x68] sm:$0xf] %v769
        %802 = vst [vmem:[%s204 + $0x6c] sm:$0xf] %v770
        %803 = vst [vmem:[%s204 + $0x70] sm:$0xf] %v771
        %804 = vst [vmem:[%s204 + $0x74] sm:$0xf] %v772
        %805 = vst [vmem:[%s204 + $0x78] sm:$0xf] %v773
        %806 = vst [vmem:[%s204 + $0x7c] sm:$0xf] %v774
        %s807 = sand.u32 %s117, 1
        %s808 = scalar_lea.sflag [#allocation3], %s807
        %s809 = sand.u32 %s117, 1
        %s810 = smul.addr %s809, 128
        %s811 = scalar_lea.vmem [#allocation2], %s810
        // Predicated region
        $region33: #{tpu_custom_call.1} parent=31 // pred_check
          %p812 = pneg %p127
        $region34: #{tpu_custom_call.1} parent=31 // pred_check_branch
          %814 = sbr.rel (%p812) target = $region36
        $region35: #{tpu_custom_call.1} parent=31 // pred_region
          %s815 = smul.u32 32, %s21
          %817 = vsyncadd %s808, 0
          %s818 = sadd.s32 %s22, %s815
          %s819 = smul.addr %s818, 4
          %s820 = scalar_lea.hbm %s3, %s819
          %s821 = sshll.u32 %s811, 4
          %s822 = int_to_ptr.vmem [resolvable:$true] %s821
          %s823 = sshll.u32 %s820, 4
          %s824 = int_to_ptr.hbm [resolvable:$true] %s823
          %829 = dma.vmem_to_hbm [thread:$0]  %s822, 2048, %s824, %s808, 64, 64, 4
        $region36: #{tpu_custom_call.1} parent=31 // pred_fallthru
          _
      $region32: #{tpu_custom_call.1} parent=5 // pred_fallthru
        _
      %p830 = scmp.le.s32.totalorder 2, %s12
      // Predicated region
      $region37: #{tpu_custom_call.1} parent=5 // pred_check
        %p831 = pneg %p830
      $region38: #{tpu_custom_call.1} parent=5 // pred_check_branch
        %833 = sbr.rel (%p831) target = $region40
      $region39: #{tpu_custom_call.1} parent=5 // pred_region
        %s834 = ssub.s32 %s12, 2
        // Predicated region
        $region41: #{tpu_custom_call.1} parent=39 // pred_check
          %p835 = pneg %p133
        $region42: #{tpu_custom_call.1} parent=39 // pred_check_branch
          %837 = sbr.rel (%p835) target = $region44
        $region43: #{tpu_custom_call.1} parent=39 // pred_region
          %s838 = sand.u32 %s118, 1
          %s839 = scalar_lea.sflag [#allocation3], %s838
          %s840 = sand.u32 %s118, 1
          %s841 = smul.addr %s840, 128
          %s842 = scalar_lea.vmem [#allocation2], %s841
          %844 = dma.done %s839, 2048
        $region44: #{tpu_custom_call.1} parent=39 // pred_fallthru
          _
      $region40: #{tpu_custom_call.1} parent=5 // pred_fallthru
        _
    $region6: #{tpu_custom_call.1} parent=1 // loop_footer
      %s16 = sadd.s32 1, %s12
    $region7: #{tpu_custom_call.1} parent=1 // loop_footer_branch
      %11 = sbr.rel target = $region3
    $region8: #{tpu_custom_call.1} parent=1 // loop_exit
      _
    %845 = vsyncpa [#allocation3], 1
    %s846 = scalar_lea.sflag [#allocation3], 1
    %847 = vsyncpa %s846, 1

</llo_original>
